<compile_context>
chip_gen: v6e
topology: v6e:2x2x1
jax: 0.10.0
libtpu: 0.0.40
codegen_flags: <defaults>
</compile_context>

<pallas_src>
import math
import functools

import jax
import jax.numpy as jnp
from jax import lax
from jax.experimental import pallas as pl
from jax.experimental.pallas import tpu as pltpu


_NEG = -1e30      # large-negative instead of -inf: avoids inf-inf -> NaN in online max
_PAD_COS = -4.0   # padded cos value: s*(-4) underflows in exp vs any real logit


def _round_up(x, n):
    return ((x + n - 1) // n) * n


def _phi_of(cos, *, margin_type, m):
    """Margin-adjusted logit phi(cos_theta), elementwise (works on jnp arrays)."""
    if margin_type == 'cos':
        return cos - m
    # 'arc'
    cos_m = math.cos(m)
    sin_m = math.sin(m)
    th = math.cos(math.pi - m)
    # clamp: |cos| can exceed 1 by fp noise from normalized dot products
    sine = jnp.sqrt(jnp.maximum(1.0 - cos * cos, 0.0))
    phi = cos * cos_m - sine * sin_m
    return jnp.where(cos > th, phi, cos - sin_m * m)


def _am_softmax_kernel(cos_ref, tgt_ref, cost_ref, phit_ref, out_ref,
                       m_scr, l_scr, *, gamma, s, t, batch):
    i = pl.program_id(0)          # batch-tile index ("parallel")
    c = pl.program_id(1)          # class-tile index ("arbitrary", innermost)
    num_c = pl.num_programs(1)
    TB, TC = cos_ref.shape

    # ---- per-batch-tile init --------------------------------------------
    @pl.when(c == 0)
    def _init():
        m_scr[...] = jnp.full((TB, 1), _NEG, jnp.float32)   # running max
        l_scr[...] = jnp.zeros((TB, 1), jnp.float32)        # running sum-exp

    cos = cos_ref[...].astype(jnp.float32)                  # (TB, TC)
    phi_tgt = phit_ref[...]                                  # (TB, 1) f32, precomputed

    if t > 1.0:
        # support-vector (hard example) re-weighting needs the per-element masks
        local_ids = lax.broadcasted_iota(jnp.int32, (1, TC), 1)
        onehot = local_ids == (tgt_ref[...] - c * TC)                 # (TB, TC)
        h_theta = (t - 1.0) + t * cos
        sv = jnp.logical_and(jnp.logical_not(onehot), (phi_tgt - cos) < 0.0)
        output = jnp.where(onehot, phi_tgt, cos)
        output = jnp.where(sv, h_theta, output)
        logits = s * output
    else:
        # fast path: plain logits; target column is corrected analytically at finalize
        logits = s * cos

    # ---- online logsumexp update ------------------------------------------
    m_new = jnp.maximum(m_scr[...], jnp.max(logits, axis=1, keepdims=True))
    alpha = jnp.exp(m_scr[...] - m_new)
    l_new = alpha * l_scr[...] + jnp.sum(jnp.exp(logits - m_new),
                                         axis=1, keepdims=True)
    m_scr[...] = m_new
    l_scr[...] = l_new

    # ---- finalize on the last class tile ------------------------------------
    @pl.when(c == num_c - 1)
    def _finalize():
        if t > 1.0:
            lse = m_new + jnp.log(l_new)
        else:
            cos_tgt = cost_ref[...]                                   # (TB, 1)
            exp_phi = jnp.exp(s * phi_tgt - m_new)
            exp_cos = jnp.exp(s * cos_tgt - m_new)
            # corrected sum is >= exp_phi in exact arithmetic (phi_tgt <= cos_tgt,
            # other terms >= 0); the clamp guards fp cancellation. Keep in f32.
            l_corr = jnp.maximum(l_new - exp_cos + exp_phi, exp_phi)
            lse = m_new + jnp.log(l_corr)
        ce = lse - s * phi_tgt                                        # (TB, 1), >= 0

        if t > 1.0 or gamma == 0.0:
            per_sample = ce
        else:
            one_minus_p = 1.0 - jnp.exp(-ce)
            if float(gamma).is_integer() and 1 <= int(gamma) <= 4:
                w = one_minus_p                                       # integer gamma:
                for _ in range(int(gamma) - 1):                       # explicit multiplies
                    w = w * one_minus_p                               # (no EUP pow)
            else:
                w = one_minus_p ** gamma
            per_sample = w * ce

        # padded rows carry finite garbage ce -> zero them here (cheap (TB,1) mask)
        row_ids = i * TB + lax.broadcasted_iota(jnp.int32, (TB, 1), 0)
        per_sample = jnp.where(row_ids < batch, per_sample, 0.0)
        out_ref[...] = jnp.broadcast_to(jnp.sum(per_sample), out_ref.shape)


def am_softmax_loss(cos_theta, target, *,
                    margin_type='cos', gamma=0.0, m=0.5, s=30.0, t=1.0,
                    block_b=256, block_c=2048):
    """AM-Softmax loss. cos_theta: (B, C) float (f32 or bf16), target: (B,) int."""
    assert margin_type in ('cos', 'arc')
    assert gamma >= 0 and m > 0 and s > 0 and t >= 1
    B, C = cos_theta.shape

    # Aim for >= 4 batch tiles so v7x's second TensorCore gets work on the
    # "parallel" axis, while keeping tiles (8, 128)-aligned.
    TB = min(_round_up(pl.cdiv(B, 4), 8), _round_up(block_b, 8))
    TC = min(_round_up(C, 128), _round_up(block_c, 128))
    nbt = pl.cdiv(B, TB)
    nct = pl.cdiv(C, TC)
    Bp, Cp = nbt * TB, nct * TC

    cos_f32 = cos_theta.astype(jnp.float32)
    tgt = target.astype(jnp.int32)

    # Wrapper-side target gather + margin: tiny (B,1) work, removes the
    # in-kernel gather pass and all per-element phi math.
    cos_tgt = jnp.take_along_axis(cos_f32, tgt[:, None], axis=1)         # (B, 1)
    phi_tgt = _phi_of(cos_tgt, margin_type=margin_type, m=m)             # (B, 1)

    # Wrapper-side padding replaces in-kernel validity masks: padded columns /
    # rows hold cos = -4 so s*cos underflows under the real row max in exp.
    cos_p = jnp.pad(cos_theta, ((0, Bp - B), (0, Cp - C)),
                    constant_values=_PAD_COS)                            # native dtype
    tgt_p = jnp.pad(tgt, (0, Bp - B)).reshape(Bp, 1)
    cos_tgt_p = jnp.pad(cos_tgt, ((0, Bp - B), (0, 0)), constant_values=_PAD_COS)
    phi_tgt_p = jnp.pad(phi_tgt, ((0, Bp - B), (0, 0)), constant_values=_PAD_COS)

    kernel = functools.partial(
        _am_softmax_kernel, gamma=float(gamma), s=float(s), t=float(t), batch=B)

    partials = pl.pallas_call(
        kernel,
        out_shape=jax.ShapeDtypeStruct((nbt, 8, 128), jnp.float32),
        grid_spec=pltpu.PrefetchScalarGridSpec(
            num_scalar_prefetch=0,
            grid=(nbt, nct),
            in_specs=[
                pl.BlockSpec((TB, TC), lambda i, c: (i, c)),   # cos_theta, native dtype
                pl.BlockSpec((TB, 1), lambda i, c: (i, 0)),    # target index
                pl.BlockSpec((TB, 1), lambda i, c: (i, 0)),    # cos at target
                pl.BlockSpec((TB, 1), lambda i, c: (i, 0)),    # phi at target
            ],
            out_specs=pl.BlockSpec((1, 8, 128), lambda i, c: (i, 0, 0)),
            scratch_shapes=[pltpu.VMEM((TB, 1), jnp.float32),   # running max
                            pltpu.VMEM((TB, 1), jnp.float32)]), # running sum-exp
        compiler_params=pltpu.CompilerParams(
            dimension_semantics=("parallel", "arbitrary"),
            vmem_limit_bytes=32 * 1024 * 1024),
    )(cos_p, tgt_p, cos_tgt_p, phi_tgt_p)

    return jnp.sum(partials[:, 0, 0]) * (1.0 / B)


def _reference_loss(cos_theta, target, *, margin_type, gamma, m, s, t):
    """Pure-JAX reference mirroring the PyTorch forward."""
    cos_theta = cos_theta.astype(jnp.float32)
    B, C = cos_theta.shape
    onehot = jax.nn.one_hot(target, C, dtype=jnp.bool_)
    if margin_type == 'cos':
        phi = cos_theta - m
    else:
        sine = jnp.sqrt(jnp.maximum(1.0 - cos_theta ** 2, 0.0))
        phi = cos_theta * math.cos(m) - sine * math.sin(m)
        phi = jnp.where(cos_theta > math.cos(math.pi - m), phi,
                        cos_theta - math.sin(m) * m)
    output = jnp.where(onehot, phi, cos_theta)
    if t > 1.0:
        h_theta = t - 1.0 + t * cos_theta
        phi_tgt = jnp.sum(jnp.where(onehot, phi, 0.0), axis=1, keepdims=True)
        sv = jnp.logical_and(~onehot, (phi_tgt - cos_theta) < 0.0)
        output = jnp.where(sv, h_theta, output)
    logits = s * output
    ce = jax.nn.logsumexp(logits, axis=1) - jnp.sum(
        jnp.where(onehot, logits, 0.0), axis=1)
    if t > 1.0 or gamma == 0.0:
        return jnp.mean(ce)
    p = jnp.exp(-ce)
    return jnp.mean((1.0 - p) ** gamma * ce)


if __name__ == "__main__":
    key = jax.random.PRNGKey(0)
    k1, k2, k3, k4 = jax.random.split(key, 4)

    # --- aligned small shape (single tile), default module config ----------
    B, C = 8, 128
    cos_theta = jnp.tanh(jax.random.normal(k1, (B, C), dtype=jnp.float32))
    target = jax.random.randint(k2, (B,), 0, C, dtype=jnp.int32)

    loss = jax.block_until_ready(
        am_softmax_loss(cos_theta, target,
                        margin_type='cos', gamma=0.0, m=0.5, s=30.0, t=1.0))
    ref = _reference_loss(cos_theta, target,
                          margin_type='cos', gamma=0.0, m=0.5, s=30.0, t=1.0)
    assert jnp.allclose(loss, ref, rtol=1e-5, atol=1e-4), (loss, ref)

    # --- non-aligned shape, multi-tile grid (wrapper padding + online LSE) ---
    B2, C2 = 10, 200
    cos2 = jnp.tanh(jax.random.normal(k3, (B2, C2), dtype=jnp.float32))
    tgt2 = jax.random.randint(k4, (B2,), 0, C2, dtype=jnp.int32)

    configs = (
        dict(margin_type='cos', gamma=0.0, m=0.5, s=30.0, t=1.0),   # plain CE
        dict(margin_type='arc', gamma=2.0, m=0.5, s=30.0, t=1.0),   # arc + focal
        dict(margin_type='cos', gamma=0.0, m=0.5, s=30.0, t=1.2),   # SV re-weighting
    )
    for cfg in configs:
        got = jax.block_until_ready(
            am_softmax_loss(cos2, tgt2, block_b=8, block_c=128, **cfg))
        want = _reference_loss(cos2, tgt2, **cfg)
        assert jnp.allclose(got, want, rtol=1e-5, atol=1e-4), (cfg, got, want)

    print("KERNEL_OK")
</pallas_src>

<mosaic_0001>
module attributes {stable_mosaic.version = 11 : i64} {
  func.func @_am_softmax_kernel(%arg0: i32, %arg1: i32, %arg2: memref<8x128xf32, #tpu.memory_space<vmem>>, %arg3: memref<8x1xi32, #tpu.memory_space<vmem>>, %arg4: memref<8x1xf32, #tpu.memory_space<vmem>>, %arg5: memref<8x1xf32, #tpu.memory_space<vmem>>, %arg6: memref<1x8x128xf32, #tpu.memory_space<vmem>>, %arg7: memref<8x1xf32, #tpu.memory_space<vmem>>, %arg8: memref<8x1xf32, #tpu.memory_space<vmem>>) attributes {dimension_semantics = [#tpu.dimension_semantics<parallel>, #tpu.dimension_semantics<arbitrary>], iteration_bounds = array<i64: 1, 1>, scalar_prefetch = 0 : i64, scratch_operands = 2 : i64, tpu.core_type = #tpu.core_type<tc>, window_params = [{transform_indices = @transform_0, window_bounds = array<i64: 8, 128>}, {transform_indices = @transform_1, window_bounds = array<i64: 8, 1>}, {transform_indices = @transform_2, window_bounds = array<i64: 8, 1>}, {transform_indices = @transform_3, window_bounds = array<i64: 8, 1>}, {transform_indices = @transform_4, window_bounds = array<i64: 1, 8, 128>}]} {
    %c0_i32 = arith.constant 0 : i32
    %0 = arith.cmpi eq, %arg1, %c0_i32 : i32
    %1 = arith.extui %0 : i1 to i32
    %c0_i32_0 = arith.constant 0 : i32
    %2 = arith.cmpi ne, %1, %c0_i32_0 : i32
    scf.if %2 {
      %cst_18 = arith.constant -1.000000e+30 : f32
      %27 = vector.broadcast %cst_18 : f32 to vector<8x1xf32>
      %c0_19 = arith.constant 0 : index
      %c0_20 = arith.constant 0 : index
      %28 = vector.load %arg7[%c0_19, %c0_20] : memref<8x1xf32, #tpu.memory_space<vmem>>, vector<8x1xf32>
      tpu.vector_store %arg7[%c0_19, %c0_20], %27 {strides = array<i32>} : memref<8x1xf32, #tpu.memory_space<vmem>>, vector<8x1xf32>,
      %cst_21 = arith.constant 0.000000e+00 : f32
      %29 = vector.broadcast %cst_21 : f32 to vector<8x1xf32>
      %c0_22 = arith.constant 0 : index
      %c0_23 = arith.constant 0 : index
      %30 = vector.load %arg8[%c0_22, %c0_23] : memref<8x1xf32, #tpu.memory_space<vmem>>, vector<8x1xf32>
      tpu.vector_store %arg8[%c0_22, %c0_23], %29 {strides = array<i32>} : memref<8x1xf32, #tpu.memory_space<vmem>>, vector<8x1xf32>,
    } else {
    }
    %c0 = arith.constant 0 : index
    %c0_1 = arith.constant 0 : index
    %3 = vector.load %arg2[%c0, %c0_1] : memref<8x128xf32, #tpu.memory_space<vmem>>, vector<8x128xf32>
    %c0_2 = arith.constant 0 : index
    %c0_3 = arith.constant 0 : index
    %4 = vector.load %arg5[%c0_2, %c0_3] : memref<8x1xf32, #tpu.memory_space<vmem>>, vector<8x1xf32>
    %cst = arith.constant 3.000000e+01 : f32
    %5 = vector.broadcast %cst : f32 to vector<8x128xf32>
    %6 = arith.mulf %5, %3 : vector<8x128xf32>
    %c0_4 = arith.constant 0 : index
    %c0_5 = arith.constant 0 : index
    %7 = vector.load %arg7[%c0_4, %c0_5] : memref<8x1xf32, #tpu.memory_space<vmem>>, vector<8x1xf32>
    %cst_6 = arith.constant dense<0xFF800000> : vector<8xf32>
    %8 = vector.multi_reduction <maximumf>, %6, %cst_6 [1] : vector<8x128xf32> to vector<8xf32>
    %9 = vector.shape_cast %8 : vector<8xf32> to vector<8x1xf32>
    %10 = arith.maximumf %7, %9 : vector<8x1xf32>
    %c0_7 = arith.constant 0 : index
    %c0_8 = arith.constant 0 : index
    %11 = vector.load %arg7[%c0_7, %c0_8] : memref<8x1xf32, #tpu.memory_space<vmem>>, vector<8x1xf32>
    %12 = arith.subf %11, %10 : vector<8x1xf32>
    %13 = math.exp %12 : vector<8x1xf32>
    %c0_9 = arith.constant 0 : index
    %c0_10 = arith.constant 0 : index
    %14 = vector.load %arg8[%c0_9, %c0_10] : memref<8x1xf32, #tpu.memory_space<vmem>>, vector<8x1xf32>
    %15 = arith.mulf %13, %14 : vector<8x1xf32>
    %16 = vector.broadcast %10 : vector<8x1xf32> to vector<8x128xf32>
    %17 = arith.subf %6, %16 : vector<8x128xf32>
    %18 = math.exp %17 : vector<8x128xf32>
    %cst_11 = arith.constant dense<0.000000e+00> : vector<8xf32>
    %19 = vector.multi_reduction <add>, %18, %cst_11 [1] : vector<8x128xf32> to vector<8xf32>
    %20 = vector.shape_cast %19 : vector<8xf32> to vector<8x1xf32>
    %21 = arith.addf %15, %20 : vector<8x1xf32>
    %c0_12 = arith.constant 0 : index
    %c0_13 = arith.constant 0 : index
    %22 = vector.load %arg7[%c0_12, %c0_13] : memref<8x1xf32, #tpu.memory_space<vmem>>, vector<8x1xf32>
    tpu.vector_store %arg7[%c0_12, %c0_13], %10 {strides = array<i32>} : memref<8x1xf32, #tpu.memory_space<vmem>>, vector<8x1xf32>,
    %c0_14 = arith.constant 0 : index
    %c0_15 = arith.constant 0 : index
    %23 = vector.load %arg8[%c0_14, %c0_15] : memref<8x1xf32, #tpu.memory_space<vmem>>, vector<8x1xf32>
    tpu.vector_store %arg8[%c0_14, %c0_15], %21 {strides = array<i32>} : memref<8x1xf32, #tpu.memory_space<vmem>>, vector<8x1xf32>,
    %c0_i32_16 = arith.constant 0 : i32
    %24 = arith.cmpi eq, %arg1, %c0_i32_16 : i32
    %25 = arith.extui %24 : i1 to i32
    %c0_i32_17 = arith.constant 0 : i32
    %26 = arith.cmpi ne, %25, %c0_i32_17 : i32
    scf.if %26 {
      %c0_18 = arith.constant 0 : index
      %c0_19 = arith.constant 0 : index
      %27 = vector.load %arg4[%c0_18, %c0_19] : memref<8x1xf32, #tpu.memory_space<vmem>>, vector<8x1xf32>
      %cst_20 = arith.constant 3.000000e+01 : f32
      %28 = vector.broadcast %cst_20 : f32 to vector<8x1xf32>
      %29 = arith.mulf %28, %4 : vector<8x1xf32>
      %30 = arith.subf %29, %10 : vector<8x1xf32>
      %31 = math.exp %30 : vector<8x1xf32>
      %cst_21 = arith.constant 3.000000e+01 : f32
      %32 = vector.broadcast %cst_21 : f32 to vector<8x1xf32>
      %33 = arith.mulf %32, %27 : vector<8x1xf32>
      %34 = arith.subf %33, %10 : vector<8x1xf32>
      %35 = math.exp %34 : vector<8x1xf32>
      %36 = arith.subf %21, %35 : vector<8x1xf32>
      %37 = arith.addf %36, %31 : vector<8x1xf32>
      %38 = arith.maximumf %37, %31 : vector<8x1xf32>
      %39 = math.log %38 : vector<8x1xf32>
      %40 = arith.addf %10, %39 : vector<8x1xf32>
      %cst_22 = arith.constant 3.000000e+01 : f32
      %41 = vector.broadcast %cst_22 : f32 to vector<8x1xf32>
      %42 = arith.mulf %41, %4 : vector<8x1xf32>
      %43 = arith.subf %40, %42 : vector<8x1xf32>
      %c8_i32 = arith.constant 8 : i32
      %44 = arith.muli %arg0, %c8_i32 : i32
      %45 = tpu.iota {dimensions = array<i32: 0>} : vector<8x1xi32>
      %46 = vector.broadcast %44 : i32 to vector<8x1xi32>
      %47 = arith.addi %46, %45 : vector<8x1xi32>
      %c8_i32_23 = arith.constant 8 : i32
      %48 = vector.broadcast %c8_i32_23 : i32 to vector<8x1xi32>
      %49 = arith.cmpi slt, %47, %48 : vector<8x1xi32>
      %cst_24 = arith.constant 0.000000e+00 : f32
      %50 = vector.broadcast %cst_24 : f32 to vector<8x1xf32>
      %51 = arith.select %49, %43, %50 : vector<8x1xi1>, vector<8x1xf32>
      %52 = vector.shape_cast %51 : vector<8x1xf32> to vector<1x8x1xf32>
      %cst_25 = arith.constant dense<0.000000e+00> : vector<1xf32>
      %53 = vector.multi_reduction <add>, %52, %cst_25 [1, 2] : vector<1x8x1xf32> to vector<1xf32>
      %54 = vector.shape_cast %53 : vector<1xf32> to vector<1x1x1xf32>
      %55 = vector.extract %54[0, 0, 0] : f32 from vector<1x1x1xf32>
      %56 = vector.broadcast %55 : f32 to vector<1x8x128xf32>
      %c0_26 = arith.constant 0 : index
      %c0_27 = arith.constant 0 : index
      %c0_28 = arith.constant 0 : index
      %57 = vector.load %arg6[%c0_26, %c0_27, %c0_28] : memref<1x8x128xf32, #tpu.memory_space<vmem>>, vector<1x8x128xf32>
      tpu.vector_store %arg6[%c0_26, %c0_27, %c0_28], %56 {strides = array<i32>} : memref<1x8x128xf32, #tpu.memory_space<vmem>>, vector<1x8x128xf32>,
    } else {
    }
    return
  }
  func.func @transform_0(%arg0: i32, %arg1: i32) -> (i32, i32) {
    %c0_i32 = arith.constant 0 : i32
    return %arg0, %arg1 : i32, i32
  }
  func.func @transform_1(%arg0: i32, %arg1: i32) -> (i32, i32) {
    %c0_i32 = arith.constant 0 : i32
    %c0_i32_0 = arith.constant 0 : i32
    return %arg0, %c0_i32 : i32, i32
  }
  func.func @transform_2(%arg0: i32, %arg1: i32) -> (i32, i32) {
    %c0_i32 = arith.constant 0 : i32
    %c0_i32_0 = arith.constant 0 : i32
    return %arg0, %c0_i32 : i32, i32
  }
  func.func @transform_3(%arg0: i32, %arg1: i32) -> (i32, i32) {
    %c0_i32 = arith.constant 0 : i32
    %c0_i32_0 = arith.constant 0 : i32
    return %arg0, %c0_i32 : i32, i32
  }
  func.func @transform_4(%arg0: i32, %arg1: i32) -> (i32, i32, i32) {
    %c0_i32 = arith.constant 0 : i32
    %c0_i32_0 = arith.constant 0 : i32
    %c0_i32_1 = arith.constant 0 : i32
    return %arg0, %c0_i32, %c0_i32_0 : i32, i32, i32
  }
}

</mosaic_0001>

<llo_original>
// kernel: tpu_custom_call.1
$region0: #{tpu_custom_call.1}
  #allocation0 [shape = 'u32[]', space=smem, size = 0x4, offset = 0x4, fixed_abs, tag = 'smem constant byte address 0x4 - core index']
  #allocation1 [shape = 'u32[144,128]{1,0:T(1,128)}', space=vmem, size = 0x12000, scoped, tag = 'internal scratch']
  #allocation2 [shape = 'f32[8,1]{1,0:T(8,128)}', space=vmem, size = 0x1000, scoped, tag = 'scratch operand']
  #allocation3 [shape = 'f32[8,1]{1,0:T(8,128)}', space=vmem, size = 0x1000, scoped, tag = 'scratch operand']
  %s0 = inlined_call_operand.vmem [shape: f32[8,128], index: 0, kind: input, shape index: {}]
  %s1 = inlined_call_operand.vmem [shape: s32[8,1], index: 1, kind: input, shape index: {}]
  %s2 = inlined_call_operand.vmem [shape: f32[8,1], index: 2, kind: input, shape index: {}]
  %s3 = inlined_call_operand.vmem [shape: f32[8,1], index: 3, kind: input, shape index: {}]
  %s4 = inlined_call_operand.hbm [shape: f32[1,8,128], index: 4, kind: output, shape index: {}]
  %s5 = sld [smem:[#allocation0]]
  $region34: #{tpu_custom_call.1} parent=0
    _
  %s7 = ssub.s32 1, %s5
  %s8 = scalar_select 0, %s7, %s5
  $region1: #{tpu_custom_call.1} parent=0
    #allocation4 [shape = 'u8[4096]{0}', space=vmem, size = 0x1000, scoped, tag = 'output window, operand 0, single buffered']
    #allocation5 [shape = 's32[1]{0}', space=sflag, size = 0x4, scoped, tag = 'scoped memory for tpu_custom_call.1']
    %9 = vsyncpa [#allocation5], 0
    // Predicated region
    $region2: #{tpu_custom_call.1} parent=1 // pred_check
      _
    $region3: #{tpu_custom_call.1} parent=1 // pred_check_branch
      %11 = sbr.rel (0) target = $region5
    $region4: #{tpu_custom_call.1} parent=1 // pred_region
      _
    $region5: #{tpu_custom_call.1} parent=1 // pred_fallthru
      _
    // Predicated region
    $region6: #{tpu_custom_call.1} parent=1 // pred_check
      _
    $region7: #{tpu_custom_call.1} parent=1 // pred_check_branch
      %13 = sbr.rel (0) target = $region9
    $region8: #{tpu_custom_call.1} parent=1 // pred_region
      _
    $region9: #{tpu_custom_call.1} parent=1 // pred_fallthru
      _
    // Predicated region
    $region10: #{tpu_custom_call.1} parent=1 // pred_check
      _
    $region11: #{tpu_custom_call.1} parent=1 // pred_check_branch
      %15 = sbr.rel (0) target = $region13
    $region12: #{tpu_custom_call.1} parent=1 // pred_region
      _
    $region13: #{tpu_custom_call.1} parent=1 // pred_fallthru
      _
    // Predicated region
    $region14: #{tpu_custom_call.1} parent=1 // pred_check
      _
    $region15: #{tpu_custom_call.1} parent=1 // pred_check_branch
      %17 = sbr.rel (0) target = $region17
    $region16: #{tpu_custom_call.1} parent=1 // pred_region
      _
    $region17: #{tpu_custom_call.1} parent=1 // pred_fallthru
      _
    %p18 = scmp.eq.s32.totalorder 0, 0
    // Predicated region
    $region18: #{tpu_custom_call.1} parent=1 // pred_check
      %p19 = pneg %p18
    $region19: #{tpu_custom_call.1} parent=1 // pred_check_branch
      %21 = sbr.rel (%p19) target = $region21
    $region20: #{tpu_custom_call.1} parent=1 // pred_region
      %vm22 = vcmask 7168
      %23 = vst.msk [vmem:[#allocation2] sm:$0xff] %vm22, -1e+30
      %24 = vst.msk [vmem:[#allocation3] sm:$0xff] %vm22, 0.0
    $region21: #{tpu_custom_call.1} parent=1 // pred_fallthru
      _
    %v25 = vld [vmem:[%s0] sm:$0xff]
    %v26 = vld [vmem:[%s3] sm:$0xff]
    %v27 = vmul.f32 %v25, 30.0
    %v28 = vld [vmem:[#allocation2] sm:$0xff]
    %29 = vmax.xlane.f32.xlu0 %v27
    %v30 = vpop.xlane.xlu0 %29
    %v31 = vmax.f32 %v28, %v30
    %v32 = vsub.f32 %v28, %v31
    %v33 = vmul.f32 %v32, 1.442695
    %v34 = vpow.pop %v33
    %v35 = vld [vmem:[#allocation3] sm:$0xff]
    %v36 = vmul.f32 %v34, %v35
    %38 = vset.pattern.permute.xlu0 0
    %39 = vperm.xlu0 %38, %v31
    %v40 = vpop.permute.xlu0 %39
    %v42 = vsub.f32 %v27, %v40
    %v43 = vmul.f32 %v42, 1.442695
    %v44 = vpow.pop %v43
    %45 = vadd.xlane.f32.xlu0 %v44
    %v46 = vpop.xlane.xlu0 %45
    %v47 = vadd.f32 %v36, %v46
    %vm48 = vcmask 7168
    %49 = vst.msk [vmem:[#allocation2] sm:$0xff] %vm48, %v31
    %50 = vst.msk [vmem:[#allocation3] sm:$0xff] %vm48, %v47
    // Predicated region
    $region22: #{tpu_custom_call.1} parent=1 // pred_check
      %p51 = pneg %p18
    $region23: #{tpu_custom_call.1} parent=1 // pred_check_branch
      %53 = sbr.rel (%p51) target = $region25
    $region24: #{tpu_custom_call.1} parent=1 // pred_region
      %v54 = vld [vmem:[%s2] sm:$0xff]
      %v55 = vmul.f32 %v26, 30.0
      %v56 = vsub.f32 %v55, %v31
      %v57 = vmul.f32 %v56, 1.442695
      %v58 = vpow.pop %v57
      %v59 = vmul.f32 %v54, 30.0
      %v60 = vsub.f32 %v59, %v31
      %v61 = vmul.f32 %v60, 1.442695
      %v62 = vpow.pop %v61
      %v63 = vsub.f32 %v47, %v62
      %v64 = vadd.f32 %v63, %v58
      %v65 = vmax.f32 %v64, %v58
      %v66 = vlog2.pop %v65
      %v67 = vmul.f32 %v66, 0.6931472
      %v68 = vadd.f32 %v31, %v67
      %v69 = vsub.f32 %v68, %v55
      %s70 = smul.u32 0, 8
      %v71 = vlaneseq
      %v72 = vshrl.u32 %v71, 7
      %v73 = vstv %s70
      %v74 = vadd.s32 %v73, %v72
      %vm75 = vcmp.lt.s32.totalorder %v74, 8
      %v76 = vsel %vm75, %v69, 0.0
      %v77 = vsel %vm48, %v76, 0.0
      %78 = vadd.xlane.f32.xlu0 %v77
      %v79 = vpop.xlane.xlu0 %78
      %v80 = vrot.slane %v79, 4
      %v81 = vadd.f32 %v79, %v80
      %v82 = vrot.slane %v81, 2
      %v83 = vadd.f32 %v81, %v82
      %v84 = vrot.slane %v83, 1
      %v85 = vadd.f32 %v83, %v84
      %s86 = vtos %v85
      %v87 = vstv %s86
      %88 = vst [vmem:[#allocation4] sm:$0xff] %v87
    $region25: #{tpu_custom_call.1} parent=1 // pred_fallthru
      _
    // Predicated region
    $region26: #{tpu_custom_call.1} parent=1 // pred_check
      _
    $region27: #{tpu_custom_call.1} parent=1 // pred_check_branch
      %90 = sbr.rel (0) target = $region29
    $region28: #{tpu_custom_call.1} parent=1 // pred_region
      %s92 = ssub.s32 128, 128
      %93 = vsyncadd [#allocation5], %s92
      %s95 = sshll.u32 [#allocation4], 4
      %s96 = int_to_ptr.vmem [resolvable:$true] %s95
      %98 = dma.vmem_to_hbm [thread:$0]  %s96, 128, %s4, [#allocation5]
    $region29: #{tpu_custom_call.1} parent=1 // pred_fallthru
      _
    // Predicated region
    $region30: #{tpu_custom_call.1} parent=1 // pred_check
      _
    $region31: #{tpu_custom_call.1} parent=1 // pred_check_branch
      %100 = sbr.rel (0) target = $region33
    $region32: #{tpu_custom_call.1} parent=1 // pred_region
      %101 = dma.done [#allocation5], 128
    $region33: #{tpu_custom_call.1} parent=1 // pred_fallthru
      _
    %102 = vsyncpa [#allocation5], 1

</llo_original>
